<compile_context>
chip_gen: v5e
topology: v5e:2x2
jax: 0.10.0
libtpu: 0.0.40
codegen_flags: <defaults>
</compile_context>

<pallas_src>
import functools

import jax
import jax.numpy as jnp
import numpy as np
from jax.experimental import pallas as pl
from jax.experimental.pallas import tpu as pltpu


# Finite "-inf" for padded vocab columns.  Must be finite: an actual -inf in
# the table would produce 0 * inf = NaN in the one-hot matmul.
_NEG_BIG = -1e30


def _round_up(x, m):
    return (x + m - 1) // m * m


def _gather_logits(ids_ref, emb_ref, logits_ref):
    """logits[j, :] = emb[ids[j], :] for the TM rows of this tile.

    Vectorized as a one-hot (TM, VROWS) x (VROWS, VPAD) matmul on the MXU.
    The one-hot is exactly {0, 1}, and HIGHEST precision keeps the selected
    f32 table rows exact (no bf16 rounding on the way through the MXU).
    """
    tm = logits_ref.shape[0]
    vrows = emb_ref.shape[0]
    ids = ids_ref[...]                                             # (TM, 1) int32
    col = jax.lax.broadcasted_iota(jnp.int32, (tm, vrows), 1)
    onehot = (col == ids).astype(jnp.float32)                      # (TM, VROWS)
    logits_ref[...] = jnp.dot(onehot, emb_ref[...],
                              precision=jax.lax.Precision.HIGHEST,
                              preferred_element_type=jnp.float32)


def _bigram_logits_kernel(ids_ref, emb_ref, logits_ref):
    _gather_logits(ids_ref, emb_ref, logits_ref)


def _bigram_loss_kernel(ids_ref, tgt_ref, emb_ref, logits_ref, nll_ref, *,
                        valid_rows):
    _gather_logits(ids_ref, emb_ref, logits_ref)

    tm, vpad = logits_ref.shape
    tile = logits_ref[...]                                         # (TM, VPAD)

    # Padded vocab columns hold -1e30 (set in the wrapper): they never win
    # the max and exp() underflows to 0, so no column mask is needed here.
    m = jnp.max(tile, axis=-1, keepdims=True)                      # (TM, 1)
    lse = m + jnp.log(jnp.sum(jnp.exp(tile - m), axis=-1, keepdims=True))

    tgt = tgt_ref[...]                                             # (TM, 1) int32
    col = jax.lax.broadcasted_iota(jnp.int32, (tm, vpad), 1)
    tgt_logit = jnp.sum(jnp.where(col == tgt, tile, 0.0),
                        axis=-1, keepdims=True)                    # (TM, 1)

    base = pl.program_id(0) * tm
    rows = base + jax.lax.broadcasted_iota(jnp.int32, (tm, 1), 0)
    # Per-row NLL; padded rows contribute exactly 0.  Summed / normalized in
    # the wrapper, so the grid axis stays fully "parallel" (megacore-safe).
    nll_ref[...] = jnp.where(rows < valid_rows, lse - tgt_logit, 0.0)


def bigram_forward(idx, emb_table, targets=None, *, block_rows=None):
    """Forward pass of BigramLanguageModel.

    idx:        (B, T) integer token ids
    emb_table:  (V, V) float32 embedding table (acts as the logit table)
    targets:    optional (B, T) integer token ids

    Returns (logits, loss):
      - if targets is None:  logits has shape (B, T, V), loss is None
      - else:                logits has shape (B*T, V), loss is a scalar
    """
    B, T = idx.shape
    V, C = emb_table.shape
    N = B * T

    vpad = _round_up(max(C, 128), 128)      # lane-dense logits / table columns
    vrows = _round_up(max(V, 128), 128)     # contracting dim of one-hot matmul

    if block_rows is None:
        # Large tiles amortize the per-grid-step overhead (~0.35 us); cap the
        # (TM, vpad) f32 logits tile at ~2 MiB so double-buffered outputs stay
        # far below the scoped VMEM limit on every generation (incl. v7x).
        max_rows = max(8, (2 * 1024 * 1024) // (vpad * 4))
        block_rows = min(1024, max_rows, _round_up(N, 8))
    tm = _round_up(block_rows, 8)
    n_pad = _round_up(N, tm)
    grid = (n_pad // tm,)

    # Valid rows/cols hold the table; padded columns hold a huge negative so
    # the kernel's logsumexp needs no masking (exp underflows to 0).
    emb_pad = jnp.full((vrows, vpad), _NEG_BIG, jnp.float32)
    emb_pad = emb_pad.at[:V, :C].set(emb_table.astype(jnp.float32))

    ids_col = jnp.zeros((n_pad, 1), jnp.int32).at[:N, 0].set(
        idx.reshape(N).astype(jnp.int32))

    ids_spec = pl.BlockSpec((tm, 1), lambda g: (g, 0))
    emb_spec = pl.BlockSpec((vrows, vpad), lambda g: (0, 0))
    logits_spec = pl.BlockSpec((tm, vpad), lambda g: (g, 0))

    if targets is None:
        logits_pad = pl.pallas_call(
            _bigram_logits_kernel,
            out_shape=jax.ShapeDtypeStruct((n_pad, vpad), jnp.float32),
            grid_spec=pltpu.PrefetchScalarGridSpec(
                num_scalar_prefetch=0,
                grid=grid,
                in_specs=[ids_spec, emb_spec],
                out_specs=logits_spec),
            compiler_params=pltpu.CompilerParams(
                dimension_semantics=("parallel",),
                vmem_limit_bytes=32 * 1024 * 1024),
        )(ids_col, emb_pad)
        logits = logits_pad if (n_pad == N and vpad == C) else logits_pad[:N, :C]
        return logits.reshape(B, T, C), None

    tgt_col = jnp.zeros((n_pad, 1), jnp.int32).at[:N, 0].set(
        targets.reshape(N).astype(jnp.int32))

    logits_pad, nll_pad = pl.pallas_call(
        functools.partial(_bigram_loss_kernel, valid_rows=N),
        out_shape=(jax.ShapeDtypeStruct((n_pad, vpad), jnp.float32),
                   jax.ShapeDtypeStruct((n_pad, 1), jnp.float32)),
        grid_spec=pltpu.PrefetchScalarGridSpec(
            num_scalar_prefetch=0,
            grid=grid,
            in_specs=[ids_spec,
                      pl.BlockSpec((tm, 1), lambda g: (g, 0)),
                      emb_spec],
            out_specs=(logits_spec,
                       pl.BlockSpec((tm, 1), lambda g: (g, 0)))),
        compiler_params=pltpu.CompilerParams(
            dimension_semantics=("parallel",),
            vmem_limit_bytes=32 * 1024 * 1024),
    )(ids_col, tgt_col, emb_pad)

    logits = logits_pad if (n_pad == N and vpad == C) else logits_pad[:N, :C]
    loss = jnp.sum(nll_pad) / N                 # padded rows contribute 0
    return logits, loss


def _reference_forward(idx, emb_table, targets):
    """Pure-JAX reference matching the PyTorch semantics."""
    B, T = idx.shape
    V = emb_table.shape[0]
    logits = emb_table[idx]                       # (B, T, V)
    logits = logits.reshape(B * T, V)
    tgt = targets.reshape(B * T)
    lse = jax.scipy.special.logsumexp(logits, axis=-1)
    tgt_logit = jnp.take_along_axis(logits, tgt[:, None], axis=-1)[:, 0]
    loss = jnp.mean(lse - tgt_logit)
    return logits, loss


if __name__ == "__main__":
    vocab_size = 65   # tiny-Shakespeare-like vocab
    B, T = 2, 8

    key = jax.random.PRNGKey(0)
    k_emb, k_idx, k_tgt = jax.random.split(key, 3)

    # nn.Embedding(vocab_size, vocab_size) ~ N(0, 1) init.
    emb_table = jax.random.normal(k_emb, (vocab_size, vocab_size), dtype=jnp.float32)

    idx = jax.random.randint(k_idx, (B, T), 0, vocab_size, dtype=jnp.int32)
    targets = jax.random.randint(k_tgt, (B, T), 0, vocab_size, dtype=jnp.int32)

    # Training path (targets given): logits (B*T, V) and mean CE loss.
    # block_rows=8 -> a 2-step grid, exercising the per-tile partial losses.
    logits, loss = bigram_forward(idx, emb_table, targets, block_rows=8)
    logits = jax.block_until_ready(logits)
    loss = jax.block_until_ready(loss)

    ref_logits, ref_loss = _reference_forward(idx, emb_table, targets)
    assert logits.shape == (B * T, vocab_size)
    assert np.allclose(np.asarray(logits), np.asarray(ref_logits), atol=1e-6)
    assert np.allclose(float(loss), float(ref_loss), rtol=1e-5, atol=1e-5)

    # Inference path (targets=None): logits (B, T, V), no loss work done.
    logits_bt, none_loss = bigram_forward(idx, emb_table, None)
    logits_bt = jax.block_until_ready(logits_bt)
    assert logits_bt.shape == (B, T, vocab_size)
    assert none_loss is None
    assert np.allclose(np.asarray(logits_bt.reshape(B * T, vocab_size)),
                       np.asarray(ref_logits), atol=1e-6)

    # Extra: ragged row count (N=14, tm=8 -> 2 padded rows) to exercise the
    # pad-row masking of both logits and NLL.
    B2, T2 = 2, 7
    idx2 = jax.random.randint(jax.random.PRNGKey(3), (B2, T2), 0, vocab_size,
                              dtype=jnp.int32)
    tgt2 = jax.random.randint(jax.random.PRNGKey(4), (B2, T2), 0, vocab_size,
                              dtype=jnp.int32)
    logits2, loss2 = bigram_forward(idx2, emb_table, tgt2, block_rows=8)
    logits2 = jax.block_until_ready(logits2)
    ref_logits2, ref_loss2 = _reference_forward(idx2, emb_table, tgt2)
    assert np.allclose(np.asarray(logits2), np.asarray(ref_logits2), atol=1e-6)
    assert np.allclose(float(loss2), float(ref_loss2), rtol=1e-5, atol=1e-5)

    print("KERNEL_OK")
</pallas_src>

<mosaic_0001>
module attributes {stable_mosaic.version = 11 : i64} {
  func.func @_bigram_loss_kernel(%arg0: i32, %arg1: memref<8x1xi32, #tpu.memory_space<vmem>>, %arg2: memref<8x1xi32, #tpu.memory_space<vmem>>, %arg3: memref<128x128xf32, #tpu.memory_space<vmem>>, %arg4: memref<8x128xf32, #tpu.memory_space<vmem>>, %arg5: memref<8x1xf32, #tpu.memory_space<vmem>>) attributes {dimension_semantics = [#tpu.dimension_semantics<parallel>], iteration_bounds = array<i64: 2>, scalar_prefetch = 0 : i64, scratch_operands = 0 : i64, tpu.core_type = #tpu.core_type<tc>, window_params = [{transform_indices = @transform_0, window_bounds = array<i64: 8, 1>}, {transform_indices = @transform_1, window_bounds = array<i64: 8, 1>}, {pipeline_mode = #tpu.pipeline_mode<synchronous>, transform_indices = @transform_2, window_bounds = array<i64: 128, 128>}, {transform_indices = @transform_3, window_bounds = array<i64: 8, 128>}, {transform_indices = @transform_4, window_bounds = array<i64: 8, 1>}]} {
    %c0 = arith.constant 0 : index
    %c0_0 = arith.constant 0 : index
    %0 = vector.load %arg1[%c0, %c0_0] : memref<8x1xi32, #tpu.memory_space<vmem>>, vector<8x1xi32>
    %1 = tpu.iota {dimensions = array<i32: 1>} : vector<8x128xi32>
    %2 = vector.broadcast %0 : vector<8x1xi32> to vector<8x128xi32>
    %3 = arith.cmpi eq, %1, %2 : vector<8x128xi32>
    %4 = arith.extui %3 : vector<8x128xi1> to vector<8x128xi32>
    %5 = arith.sitofp %4 : vector<8x128xi32> to vector<8x128xf32>
    %c0_1 = arith.constant 0 : index
    %c0_2 = arith.constant 0 : index
    %6 = vector.load %arg3[%c0_1, %c0_2] : memref<128x128xf32, #tpu.memory_space<vmem>>, vector<128x128xf32>
    %cst = arith.constant dense<0.000000e+00> : vector<8x128xf32>
    %7 = tpu.matmul %5, %6, %cst {dimension_numbers = #tpu.dot_dimension_numbers<[1], [0], [0], [1], [0, 0, 1, 1], [], []>, precision = #tpu.contract_precision<fp32>} : vector<8x128xf32>, vector<128x128xf32>, vector<8x128xf32> -> vector<8x128xf32>
    %c0_3 = arith.constant 0 : index
    %c0_4 = arith.constant 0 : index
    %8 = vector.load %arg4[%c0_3, %c0_4] : memref<8x128xf32, #tpu.memory_space<vmem>>, vector<8x128xf32>
    tpu.vector_store %arg4[%c0_3, %c0_4], %7 {strides = array<i32>} : memref<8x128xf32, #tpu.memory_space<vmem>>, vector<8x128xf32>,
    %c0_5 = arith.constant 0 : index
    %c0_6 = arith.constant 0 : index
    %9 = vector.load %arg4[%c0_5, %c0_6] : memref<8x128xf32, #tpu.memory_space<vmem>>, vector<8x128xf32>
    %cst_7 = arith.constant dense<0xFF800000> : vector<8xf32>
    %10 = vector.multi_reduction <maximumf>, %9, %cst_7 [1] : vector<8x128xf32> to vector<8xf32>
    %11 = vector.shape_cast %10 : vector<8xf32> to vector<8x1xf32>
    %12 = vector.broadcast %11 : vector<8x1xf32> to vector<8x128xf32>
    %13 = arith.subf %9, %12 : vector<8x128xf32>
    %14 = math.exp %13 : vector<8x128xf32>
    %cst_8 = arith.constant dense<0.000000e+00> : vector<8xf32>
    %15 = vector.multi_reduction <add>, %14, %cst_8 [1] : vector<8x128xf32> to vector<8xf32>
    %16 = vector.shape_cast %15 : vector<8xf32> to vector<8x1xf32>
    %17 = math.log %16 : vector<8x1xf32>
    %18 = arith.addf %11, %17 : vector<8x1xf32>
    %c0_9 = arith.constant 0 : index
    %c0_10 = arith.constant 0 : index
    %19 = vector.load %arg2[%c0_9, %c0_10] : memref<8x1xi32, #tpu.memory_space<vmem>>, vector<8x1xi32>
    %20 = tpu.iota {dimensions = array<i32: 1>} : vector<8x128xi32>
    %21 = vector.broadcast %19 : vector<8x1xi32> to vector<8x128xi32>
    %22 = arith.cmpi eq, %20, %21 : vector<8x128xi32>
    %cst_11 = arith.constant 0.000000e+00 : f32
    %23 = vector.broadcast %cst_11 : f32 to vector<8x128xf32>
    %24 = arith.select %22, %9, %23 : vector<8x128xi1>, vector<8x128xf32>
    %cst_12 = arith.constant dense<0.000000e+00> : vector<8xf32>
    %25 = vector.multi_reduction <add>, %24, %cst_12 [1] : vector<8x128xf32> to vector<8xf32>
    %26 = vector.shape_cast %25 : vector<8xf32> to vector<8x1xf32>
    %c8_i32 = arith.constant 8 : i32
    %27 = arith.muli %arg0, %c8_i32 : i32
    %28 = tpu.iota {dimensions = array<i32: 0>} : vector<8x1xi32>
    %29 = vector.broadcast %27 : i32 to vector<8x1xi32>
    %30 = arith.addi %29, %28 : vector<8x1xi32>
    %c16_i32 = arith.constant 16 : i32
    %31 = vector.broadcast %c16_i32 : i32 to vector<8x1xi32>
    %32 = arith.cmpi slt, %30, %31 : vector<8x1xi32>
    %33 = arith.subf %18, %26 : vector<8x1xf32>
    %cst_13 = arith.constant 0.000000e+00 : f32
    %34 = vector.broadcast %cst_13 : f32 to vector<8x1xf32>
    %35 = arith.select %32, %33, %34 : vector<8x1xi1>, vector<8x1xf32>
    %c0_14 = arith.constant 0 : index
    %c0_15 = arith.constant 0 : index
    %36 = vector.load %arg5[%c0_14, %c0_15] : memref<8x1xf32, #tpu.memory_space<vmem>>, vector<8x1xf32>
    tpu.vector_store %arg5[%c0_14, %c0_15], %35 {strides = array<i32>} : memref<8x1xf32, #tpu.memory_space<vmem>>, vector<8x1xf32>,
    return
  }
  func.func @transform_0(%arg0: i32) -> (i32, i32) {
    %c0_i32 = arith.constant 0 : i32
    %c0_i32_0 = arith.constant 0 : i32
    return %arg0, %c0_i32 : i32, i32
  }
  func.func @transform_1(%arg0: i32) -> (i32, i32) {
    %c0_i32 = arith.constant 0 : i32
    %c0_i32_0 = arith.constant 0 : i32
    return %arg0, %c0_i32 : i32, i32
  }
  func.func @transform_2(%arg0: i32) -> (i32, i32) {
    %c0_i32 = arith.constant 0 : i32
    %c0_i32_0 = arith.constant 0 : i32
    %c0_i32_1 = arith.constant 0 : i32
    return %c0_i32, %c0_i32_0 : i32, i32
  }
  func.func @transform_3(%arg0: i32) -> (i32, i32) {
    %c0_i32 = arith.constant 0 : i32
    %c0_i32_0 = arith.constant 0 : i32
    return %arg0, %c0_i32 : i32, i32
  }
  func.func @transform_4(%arg0: i32) -> (i32, i32) {
    %c0_i32 = arith.constant 0 : i32
    %c0_i32_0 = arith.constant 0 : i32
    return %arg0, %c0_i32 : i32, i32
  }
}

</mosaic_0001>

<llo_original>
// kernel: tpu_custom_call.1
$region0: #{tpu_custom_call.1}
  #allocation0 [shape = 'u32[]', space=smem, size = 0x4, offset = 0x4, fixed_abs, tag = 'smem constant byte address 0x4 - core index']
  #allocation1 [shape = 'u32[72,128]{1,0:T(1,128)}', space=vmem, size = 0x9000, scoped, tag = 'internal scratch']
  %s0 = inlined_call_operand.vmem [shape: s32[16,1], index: 0, kind: input, shape index: {}]
  %s1 = inlined_call_operand.vmem [shape: s32[16,1], index: 1, kind: input, shape index: {}]
  %s2 = inlined_call_operand.hbm [shape: f32[128,128], index: 2, kind: input, shape index: {}]
  %s3 = inlined_call_operand.hbm [shape: f32[16,128], index: 3, kind: output, shape index: {0}]
  %s4 = inlined_call_operand.vmem [shape: f32[16,1], index: 4, kind: output, shape index: {1}]
  %5 = xla_tuple %s3, %s4
  %s6 = sld [smem:[#allocation0]]
  $region57: #{tpu_custom_call.1} parent=0
    _
  %s8 = ssub.s32 1, %s6
  %s9 = scalar_select 0, %s8, %s6
  $region1: #{tpu_custom_call.1} parent=0
    #allocation2 [shape = 'u8[65536]{0}', space=vmem, size = 0x10000, scoped, tag = 'input window, operand 2, single buffered']
    #allocation3 [shape = 's32[2]{0}', space=sflag, size = 0x8, scoped, tag = 'scoped memory for tpu_custom_call.1']
    #allocation4 [shape = 's32[2]{0}', space=sflag, size = 0x8, scoped, tag = 'scoped memory for tpu_custom_call.1']
    #allocation5 [shape = 'u8[8192]{0}', space=vmem, size = 0x2000, scoped, tag = 'output window, operand 0']
    %10 = vsyncpa [#allocation3], 0
    %11 = vsyncpa [#allocation4], 0
    %s12 = scalar_lea.sflag [#allocation4], 1
    %13 = vsyncpa %s12, 0
    loop: start=0, step=1, limit=4
    $region2: #{tpu_custom_call.1} parent=1 // loop_pre_header
      _
    $region3: #{tpu_custom_call.1} parent=1 // loop_header
      %s15 = sphi 0, %s19
      %p16 = scmp.ge.s32.totalorder %s15, 4
      %s25 = sphi 0, %s27
      %s28 = sphi 0, %s25
      %s29 = sphi 0, %s28
      %s45 = sphi 0, %s29
      %s51 = sphi 0, %s53
      %s54 = sphi 0, %s51
      %s55 = sphi 0, %s54
      %s71 = sphi 0, %s55
      %s75 = sphi 0, %s75
      %s77 = sphi 0, %s75
      %s78 = sphi 0, %s77
      %s92 = sphi 0, %s78
      %s98 = sphi 0, %s100
      %s101 = sphi 0, %s98
      %s102 = sphi 0, %s101
      %s118 = sphi 0, %s102
      %s124 = sphi 0, %s126
      %s127 = sphi 0, %s124
      %s128 = sphi 0, %s127
      %s144 = sphi 0, %s128
    $region4: #{tpu_custom_call.1} parent=1 // loop_header_branch
      %18 = sbr.rel (%p16) target = $region8
    $region5: #{tpu_custom_call.1} parent=1 // loop_body
      %s20 = ssub.s32 %s15, 1
      %s21 = ssub.s32 %s15, 2
      %s22 = sadd.s32 %s15, 1
      %s23 = ssub.s32 %s15, %s22
      %p24 = scmp.eq.s32.totalorder %s23, 0
      %s26 = sadd.s32 %s25, 1
      %s27 = scalar_select %p24, %s25, %s26
      %p30 = pneg %p24
      %p31 = scmp.eq.s32.totalorder %s15, 1
      %p32 = por %p30, %p31
      %p33 = scmp.ne.s32.totalorder %s25, %s28
      %p34 = scmp.eq.s32.totalorder %s15, 0
      %p35 = por %p33, %p34
      %p36 = scmp.ne.s32.totalorder %s25, %s28
      %p37 = scmp.eq.s32.totalorder %s20, 1
      %p38 = por %p36, %p37
      %p39 = scmp.ne.s32.totalorder %s28, %s29
      %p40 = scmp.eq.s32.totalorder %s20, 0
      %p41 = por %p39, %p40
      %p42 = scmp.ne.s32.totalorder %s28, %s29
      %p43 = scmp.eq.s32.totalorder %s21, 1
      %p44 = por %p42, %p43
      %p46 = scmp.ne.s32.totalorder %s29, %s45
      %p47 = scmp.eq.s32.totalorder %s21, 0
      %p48 = por %p46, %p47
      %s49 = ssub.s32 %s15, %s22
      %p50 = scmp.eq.s32.totalorder %s49, 0
      %s52 = sadd.s32 %s51, 1
      %s53 = scalar_select %p50, %s51, %s52
      %p56 = pneg %p50
      %p57 = scmp.eq.s32.totalorder %s15, 1
      %p58 = por %p56, %p57
      %p59 = scmp.ne.s32.totalorder %s51, %s54
      %p60 = scmp.eq.s32.totalorder %s15, 0
      %p61 = por %p59, %p60
      %p62 = scmp.ne.s32.totalorder %s51, %s54
      %p63 = scmp.eq.s32.totalorder %s20, 1
      %p64 = por %p62, %p63
      %p65 = scmp.ne.s32.totalorder %s54, %s55
      %p66 = scmp.eq.s32.totalorder %s20, 0
      %p67 = por %p65, %p66
      %p68 = scmp.ne.s32.totalorder %s54, %s55
      %p69 = scmp.eq.s32.totalorder %s21, 1
      %p70 = por %p68, %p69
      %p72 = scmp.ne.s32.totalorder %s55, %s71
      %p73 = scmp.eq.s32.totalorder %s21, 0
      %p74 = por %p72, %p73
      %s76 = sadd.s32 %s75, 1
      %p79 = scmp.eq.s32.totalorder %s15, 1
      %p80 = scmp.ne.s32.totalorder %s75, %s77
      %p81 = scmp.eq.s32.totalorder %s15, 0
      %p82 = por %p80, %p81
      %p83 = scmp.ne.s32.totalorder %s75, %s77
      %p84 = scmp.eq.s32.totalorder %s20, 1
      %p85 = por %p83, %p84
      %p86 = scmp.ne.s32.totalorder %s77, %s78
      %p87 = scmp.eq.s32.totalorder %s20, 0
      %p88 = por %p86, %p87
      %p89 = scmp.ne.s32.totalorder %s77, %s78
      %p90 = scmp.eq.s32.totalorder %s21, 1
      %p91 = por %p89, %p90
      %p93 = scmp.ne.s32.totalorder %s78, %s92
      %p94 = scmp.eq.s32.totalorder %s21, 0
      %p95 = por %p93, %p94
      %s96 = ssub.s32 %s15, %s22
      %p97 = scmp.eq.s32.totalorder %s96, 0
      %s99 = sadd.s32 %s98, 1
      %s100 = scalar_select %p97, %s98, %s99
      %p103 = pneg %p97
      %p104 = scmp.eq.s32.totalorder %s15, 1
      %p105 = por %p103, %p104
      %p106 = scmp.ne.s32.totalorder %s98, %s101
      %p107 = scmp.eq.s32.totalorder %s15, 0
      %p108 = por %p106, %p107
      %p109 = scmp.ne.s32.totalorder %s98, %s101
      %p110 = scmp.eq.s32.totalorder %s20, 1
      %p111 = por %p109, %p110
      %p112 = scmp.ne.s32.totalorder %s101, %s102
      %p113 = scmp.eq.s32.totalorder %s20, 0
      %p114 = por %p112, %p113
      %p115 = scmp.ne.s32.totalorder %s101, %s102
      %p116 = scmp.eq.s32.totalorder %s21, 1
      %p117 = por %p115, %p116
      %p119 = scmp.ne.s32.totalorder %s102, %s118
      %p120 = scmp.eq.s32.totalorder %s21, 0
      %p121 = por %p119, %p120
      %s122 = ssub.s32 %s15, %s22
      %p123 = scmp.eq.s32.totalorder %s122, 0
      %s125 = sadd.s32 %s124, 1
      %s126 = scalar_select %p123, %s124, %s125
      %p129 = pneg %p123
      %p130 = scmp.eq.s32.totalorder %s15, 1
      %p131 = por %p129, %p130
      %p132 = scmp.ne.s32.totalorder %s124, %s127
      %p133 = scmp.eq.s32.totalorder %s15, 0
      %p134 = por %p132, %p133
      %p135 = scmp.ne.s32.totalorder %s124, %s127
      %p136 = scmp.eq.s32.totalorder %s20, 1
      %p137 = por %p135, %p136
      %p138 = scmp.ne.s32.totalorder %s127, %s128
      %p139 = scmp.eq.s32.totalorder %s20, 0
      %p140 = por %p138, %p139
      %p141 = scmp.ne.s32.totalorder %s127, %s128
      %p142 = scmp.eq.s32.totalorder %s21, 1
      %p143 = por %p141, %p142
      %p145 = scmp.ne.s32.totalorder %s128, %s144
      %p146 = scmp.eq.s32.totalorder %s21, 0
      %p147 = por %p145, %p146
      %p148 = scmp.le.s32.totalorder 1, %s15
      %p149 = scmp.lt.s32.totalorder %s15, 3
      %p150 = pnand %p148, %p149
      %p151 = pneg %p150
      // Predicated region
      $region9: #{tpu_custom_call.1} parent=5 // pred_check
        _
      $region10: #{tpu_custom_call.1} parent=5 // pred_check_branch
        %153 = sbr.rel (%p150) target = $region12
      $region11: #{tpu_custom_call.1} parent=5 // pred_region
        %s154 = ssub.s32 %s15, 1
        // Predicated region
        $region13: #{tpu_custom_call.1} parent=11 // pred_check
          %p155 = pneg %p88
        $region14: #{tpu_custom_call.1} parent=11 // pred_check_branch
          %157 = sbr.rel (%p155) target = $region16
        $region15: #{tpu_custom_call.1} parent=11 // pred_region
          %159 = vsyncadd [#allocation3], 0
          %s160 = sshll.u32 %s2, 4
          %s161 = int_to_ptr.hbm [resolvable:$true] %s160
          %s162 = sshll.u32 [#allocation2], 4
          %s163 = int_to_ptr.vmem [resolvable:$true] %s162
          %168 = dma.hbm_to_vmem [thread:$0]  %s161, 2048, %s163, [#allocation3], 128, 128, 8
        $region16: #{tpu_custom_call.1} parent=11 // pred_fallthru
          _
      $region12: #{tpu_custom_call.1} parent=5 // pred_fallthru
        _
      %p169 = scmp.lt.s32.totalorder %s15, 2
      // Predicated region
      $region17: #{tpu_custom_call.1} parent=5 // pred_check
        %p170 = pneg %p169
      $region18: #{tpu_custom_call.1} parent=5 // pred_check_branch
        %172 = sbr.rel (%p170) target = $region20
      $region19: #{tpu_custom_call.1} parent=5 // pred_region
        // Predicated region
        $region21: #{tpu_custom_call.1} parent=19 // pred_check
          %p173 = pneg %p35
        $region22: #{tpu_custom_call.1} parent=19 // pred_check_branch
          %175 = sbr.rel (%p173) target = $region24
        $region23: #{tpu_custom_call.1} parent=19 // pred_region
          %p176 = scmp.lt.s32.totalorder %s15, 1
          %s177 = scalar_select %p176, %s15, 1
          %s178 = smul.addr %s177, 8
          %s179 = scalar_lea.vmem %s0, %s178
        $region24: #{tpu_custom_call.1} parent=19 // pred_fallthru
          _
        // Predicated region
        $region25: #{tpu_custom_call.1} parent=19 // pred_check
          %p180 = pneg %p61
        $region26: #{tpu_custom_call.1} parent=19 // pred_check_branch
          %182 = sbr.rel (%p180) target = $region28
        $region27: #{tpu_custom_call.1} parent=19 // pred_region
          %p183 = scmp.lt.s32.totalorder %s15, 1
          %s184 = scalar_select %p183, %s15, 1
          %s185 = smul.addr %s184, 8
          %s186 = scalar_lea.vmem %s1, %s185
        $region28: #{tpu_custom_call.1} parent=19 // pred_fallthru
          _
      $region20: #{tpu_custom_call.1} parent=5 // pred_fallthru
        _
      %p187 = scmp.le.s32.totalorder 1, %s15
      %p188 = scmp.lt.s32.totalorder %s15, 3
      %p189 = pnand %p187, %p188
      %p190 = pneg %p189
      // Predicated region
      $region29: #{tpu_custom_call.1} parent=5 // pred_check
        _
      $region30: #{tpu_custom_call.1} parent=5 // pred_check_branch
        %192 = sbr.rel (%p189) target = $region32
      $region31: #{tpu_custom_call.1} parent=5 // pred_region
        %s193 = ssub.s32 %s15, 1
        // Predicated region
        $region33: #{tpu_custom_call.1} parent=31 // pred_check
          %p194 = pneg %p88
        $region34: #{tpu_custom_call.1} parent=31 // pred_check_branch
          %196 = sbr.rel (%p194) target = $region36
        $region35: #{tpu_custom_call.1} parent=31 // pred_region
          %198 = dma.done [#allocation3], 2048
        $region36: #{tpu_custom_call.1} parent=31 // pred_fallthru
          _
        %p199 = scmp.lt.s32.totalorder %s20, 1
        %s200 = scalar_select %p199, %s20, 1
        %s201 = smul.addr %s200, 8
        %s202 = scalar_lea.vmem %s0, %s201
        %p203 = pneg %p41
        %p204 = pneg %p38
        %p205 = scmp.lt.s32.totalorder %s20, 1
        %s206 = scalar_select %p205, %s20, 1
        %s207 = smul.addr %s206, 8
        %s208 = scalar_lea.vmem %s1, %s207
        %p209 = pneg %p67
        %p210 = pneg %p64
        %p211 = pneg %p88
        %p212 = pneg %p85
        %p213 = pneg %p114
        %p214 = pneg %p111
        %s215 = sand.u32 %s101, 1
        %s216 = scalar_lea.sflag [#allocation4], %s215
        %s217 = sand.u32 %s101, 1
        %s218 = smul.addr %s217, 8
        %s219 = scalar_lea.vmem [#allocation5], %s218
        %p220 = pneg %p140
        %p221 = pneg %p137
        %p222 = scmp.lt.s32.totalorder %s20, 1
        %s223 = scalar_select %p222, %s20, 1
        %s224 = smul.addr %s223, 8
        %s225 = scalar_lea.vmem %s4, %s224
        %p226 = scmp.lt.s32.totalorder %s20, 1
        %s227 = scalar_select %p226, %s20, 1
        %s228 = smul.addr %s227, 8
        %s229 = scalar_lea.vmem %s0, %s228
        %p230 = scmp.lt.s32.totalorder %s20, 1
        %s231 = scalar_select %p230, %s20, 1
        %s232 = smul.addr %s231, 8
        %s233 = scalar_lea.vmem %s1, %s232
        %p234 = scmp.lt.s32.totalorder %s20, 1
        %s235 = scalar_select %p234, %s20, 1
        %s236 = smul.addr %s235, 8
        %s237 = scalar_lea.vmem %s4, %s236
        %v238 = vld [vmem:[%s229] sm:$0xff]
        %v239 = vlaneseq
        %v240 = vand.u32 %v239, 127
        %241 = vset.pattern.permute.xlu0 0
        %242 = vperm.xlu0 %241, %v238
        %v243 = vpop.permute.xlu0 %242
        %vm244 = vcmp.eq.s32.totalorder %v240, %v243
        %v245 = vsel %vm244, 1, 0
        %v246 = vcvt.s32.f32 %v245
        %v247 = vld [vmem:[#allocation2] sm:$0xff]
        %v248 = vld [vmem:[#allocation2 + $0x8] sm:$0xff]
        %v249 = vld [vmem:[#allocation2 + $0x10] sm:$0xff]
        %v250 = vld [vmem:[#allocation2 + $0x18] sm:$0xff]
        %v251 = vld [vmem:[#allocation2 + $0x20] sm:$0xff]
        %v252 = vld [vmem:[#allocation2 + $0x28] sm:$0xff]
        %v253 = vld [vmem:[#allocation2 + $0x30] sm:$0xff]
        %v254 = vld [vmem:[#allocation2 + $0x38] sm:$0xff]
        %v255 = vld [vmem:[#allocation2 + $0x40] sm:$0xff]
        %v256 = vld [vmem:[#allocation2 + $0x48] sm:$0xff]
        %v257 = vld [vmem:[#allocation2 + $0x50] sm:$0xff]
        %v258 = vld [vmem:[#allocation2 + $0x58] sm:$0xff]
        %v259 = vld [vmem:[#allocation2 + $0x60] sm:$0xff]
        %v260 = vld [vmem:[#allocation2 + $0x68] sm:$0xff]
        %v261 = vld [vmem:[#allocation2 + $0x70] sm:$0xff]
        %v262 = vld [vmem:[#allocation2 + $0x78] sm:$0xff]
        %v263 = vand.u32 %v262, 4294901760
        %264 = vmatpush.msra.mxu0 %v263
        %v265 = vand.u32 %v261, 4294901760
        %266 = vmatpush.msra.mxu0 %v265
        %v267 = vand.u32 %v260, 4294901760
        %268 = vmatpush.msra.mxu0 %v267
        %v269 = vand.u32 %v259, 4294901760
        %270 = vmatpush.msra.mxu0 %v269
        %v271 = vand.u32 %v258, 4294901760
        %272 = vmatpush.msra.mxu0 %v271
        %v273 = vand.u32 %v257, 4294901760
        %274 = vmatpush.msra.mxu0 %v273
        %v275 = vand.u32 %v256, 4294901760
        %276 = vmatpush.msra.mxu0 %v275
        %v277 = vand.u32 %v255, 4294901760
        %278 = vmatpush.msra.mxu0 %v277
        %v279 = vand.u32 %v254, 4294901760
        %280 = vmatpush.msra.mxu0 %v279
        %v281 = vand.u32 %v253, 4294901760
        %282 = vmatpush.msra.mxu0 %v281
        %v283 = vand.u32 %v252, 4294901760
        %284 = vmatpush.msra.mxu0 %v283
        %v285 = vand.u32 %v251, 4294901760
        %286 = vmatpush.msra.mxu0 %v285
        %v287 = vand.u32 %v250, 4294901760
        %288 = vmatpush.msra.mxu0 %v287
        %v289 = vand.u32 %v249, 4294901760
        %290 = vmatpush.msra.mxu0 %v289
        %v291 = vand.u32 %v248, 4294901760
        %292 = vmatpush.msra.mxu0 %v291
        %v293 = vand.u32 %v247, 4294901760
        %294 = vmatpush.msra.mxu0 %v293
        %v295 = vand.u32 %v246, 4294901760
        %v296 = vsub.f32 %v246, %v295
        %v297 = vand.u32 %v296, 4294901760
        %v298 = vsub.f32 %v296, %v297
        %v299 = vand.u32 %v298, 4294901760
        %300 = vmatmul.f32.gmra.mxu0 %v299
        %v301 = vpop.f32.mrf.mxu0
        %v302 = vadd.f32 0.0, %v301
        %303 = vdwg.mxu0
        %v304 = vand.u32 %v262, 4294901760
        %v305 = vsub.f32 %v262, %v304
        %v306 = vand.u32 %v305, 4294901760
        %v307 = vsub.f32 %v305, %v306
        %v308 = vand.u32 %v307, 4294901760
        %309 = vmatpush.msra.mxu0 %v308
        %v310 = vand.u32 %v261, 4294901760
        %v311 = vsub.f32 %v261, %v310
        %v312 = vand.u32 %v311, 4294901760
        %v313 = vsub.f32 %v311, %v312
        %v314 = vand.u32 %v313, 4294901760
        %315 = vmatpush.msra.mxu0 %v314
        %v316 = vand.u32 %v260, 4294901760
        %v317 = vsub.f32 %v260, %v316
        %v318 = vand.u32 %v317, 4294901760
        %v319 = vsub.f32 %v317, %v318
        %v320 = vand.u32 %v319, 4294901760
        %321 = vmatpush.msra.mxu0 %v320
        %v322 = vand.u32 %v259, 4294901760
        %v323 = vsub.f32 %v259, %v322
        %v324 = vand.u32 %v323, 4294901760
        %v325 = vsub.f32 %v323, %v324
        %v326 = vand.u32 %v325, 4294901760
        %327 = vmatpush.msra.mxu0 %v326
        %v328 = vand.u32 %v258, 4294901760
        %v329 = vsub.f32 %v258, %v328
        %v330 = vand.u32 %v329, 4294901760
        %v331 = vsub.f32 %v329, %v330
        %v332 = vand.u32 %v331, 4294901760
        %333 = vmatpush.msra.mxu0 %v332
        %v334 = vand.u32 %v257, 4294901760
        %v335 = vsub.f32 %v257, %v334
        %v336 = vand.u32 %v335, 4294901760
        %v337 = vsub.f32 %v335, %v336
        %v338 = vand.u32 %v337, 4294901760
        %339 = vmatpush.msra.mxu0 %v338
        %v340 = vand.u32 %v256, 4294901760
        %v341 = vsub.f32 %v256, %v340
        %v342 = vand.u32 %v341, 4294901760
        %v343 = vsub.f32 %v341, %v342
        %v344 = vand.u32 %v343, 4294901760
        %345 = vmatpush.msra.mxu0 %v344
        %v346 = vand.u32 %v255, 4294901760
        %v347 = vsub.f32 %v255, %v346
        %v348 = vand.u32 %v347, 4294901760
        %v349 = vsub.f32 %v347, %v348
        %v350 = vand.u32 %v349, 4294901760
        %351 = vmatpush.msra.mxu0 %v350
        %v352 = vand.u32 %v254, 4294901760
        %v353 = vsub.f32 %v254, %v352
        %v354 = vand.u32 %v353, 4294901760
        %v355 = vsub.f32 %v353, %v354
        %v356 = vand.u32 %v355, 4294901760
        %357 = vmatpush.msra.mxu0 %v356
        %v358 = vand.u32 %v253, 4294901760
        %v359 = vsub.f32 %v253, %v358
        %v360 = vand.u32 %v359, 4294901760
        %v361 = vsub.f32 %v359, %v360
        %v362 = vand.u32 %v361, 4294901760
        %363 = vmatpush.msra.mxu0 %v362
        %v364 = vand.u32 %v252, 4294901760
        %v365 = vsub.f32 %v252, %v364
        %v366 = vand.u32 %v365, 4294901760
        %v367 = vsub.f32 %v365, %v366
        %v368 = vand.u32 %v367, 4294901760
        %369 = vmatpush.msra.mxu0 %v368
        %v370 = vand.u32 %v251, 4294901760
        %v371 = vsub.f32 %v251, %v370
        %v372 = vand.u32 %v371, 4294901760
        %v373 = vsub.f32 %v371, %v372
        %v374 = vand.u32 %v373, 4294901760
        %375 = vmatpush.msra.mxu0 %v374
        %v376 = vand.u32 %v250, 4294901760
        %v377 = vsub.f32 %v250, %v376
        %v378 = vand.u32 %v377, 4294901760
        %v379 = vsub.f32 %v377, %v378
        %v380 = vand.u32 %v379, 4294901760
        %381 = vmatpush.msra.mxu0 %v380
        %v382 = vand.u32 %v249, 4294901760
        %v383 = vsub.f32 %v249, %v382
        %v384 = vand.u32 %v383, 4294901760
        %v385 = vsub.f32 %v383, %v384
        %v386 = vand.u32 %v385, 4294901760
        %387 = vmatpush.msra.mxu0 %v386
        %v388 = vand.u32 %v248, 4294901760
        %v389 = vsub.f32 %v248, %v388
        %v390 = vand.u32 %v389, 4294901760
        %v391 = vsub.f32 %v389, %v390
        %v392 = vand.u32 %v391, 4294901760
        %393 = vmatpush.msra.mxu0 %v392
        %v394 = vand.u32 %v247, 4294901760
        %v395 = vsub.f32 %v247, %v394
        %v396 = vand.u32 %v395, 4294901760
        %v397 = vsub.f32 %v395, %v396
        %v398 = vand.u32 %v397, 4294901760
        %399 = vmatpush.msra.mxu0 %v398
        %v400 = vand.u32 %v246, 4294901760
        %401 = vmatmul.f32.gmra.mxu0 %v400
        %v402 = vpop.f32.mrf.mxu0
        %v403 = vadd.f32 %v302, %v402
        %404 = vdwg.mxu0
        %v405 = vand.u32 %v262, 4294901760
        %v406 = vsub.f32 %v262, %v405
        %407 = vmatpush.msra.mxu0 %v406
        %v408 = vand.u32 %v261, 4294901760
        %v409 = vsub.f32 %v261, %v408
        %410 = vmatpush.msra.mxu0 %v409
        %v411 = vand.u32 %v260, 4294901760
        %v412 = vsub.f32 %v260, %v411
        %413 = vmatpush.msra.mxu0 %v412
        %v414 = vand.u32 %v259, 4294901760
        %v415 = vsub.f32 %v259, %v414
        %416 = vmatpush.msra.mxu0 %v415
        %v417 = vand.u32 %v258, 4294901760
        %v418 = vsub.f32 %v258, %v417
        %419 = vmatpush.msra.mxu0 %v418
        %v420 = vand.u32 %v257, 4294901760
        %v421 = vsub.f32 %v257, %v420
        %422 = vmatpush.msra.mxu0 %v421
        %v423 = vand.u32 %v256, 4294901760
        %v424 = vsub.f32 %v256, %v423
        %425 = vmatpush.msra.mxu0 %v424
        %v426 = vand.u32 %v255, 4294901760
        %v427 = vsub.f32 %v255, %v426
        %428 = vmatpush.msra.mxu0 %v427
        %v429 = vand.u32 %v254, 4294901760
        %v430 = vsub.f32 %v254, %v429
        %431 = vmatpush.msra.mxu0 %v430
        %v432 = vand.u32 %v253, 4294901760
        %v433 = vsub.f32 %v253, %v432
        %434 = vmatpush.msra.mxu0 %v433
        %v435 = vand.u32 %v252, 4294901760
        %v436 = vsub.f32 %v252, %v435
        %437 = vmatpush.msra.mxu0 %v436
        %v438 = vand.u32 %v251, 4294901760
        %v439 = vsub.f32 %v251, %v438
        %440 = vmatpush.msra.mxu0 %v439
        %v441 = vand.u32 %v250, 4294901760
        %v442 = vsub.f32 %v250, %v441
        %443 = vmatpush.msra.mxu0 %v442
        %v444 = vand.u32 %v249, 4294901760
        %v445 = vsub.f32 %v249, %v444
        %446 = vmatpush.msra.mxu0 %v445
        %v447 = vand.u32 %v248, 4294901760
        %v448 = vsub.f32 %v248, %v447
        %449 = vmatpush.msra.mxu0 %v448
        %v450 = vand.u32 %v247, 4294901760
        %v451 = vsub.f32 %v247, %v450
        %452 = vmatpush.msra.mxu0 %v451
        %v453 = vand.u32 %v246, 4294901760
        %v454 = vsub.f32 %v246, %v453
        %455 = vmatmul.f32.gmra.mxu0 %v454
        %v456 = vpop.f32.mrf.mxu0
        %v457 = vadd.f32 %v403, %v456
        %458 = vdwg.mxu0
        %v459 = vand.u32 %v262, 4294901760
        %460 = vmatpush.msra.mxu0 %v459
        %v461 = vand.u32 %v261, 4294901760
        %462 = vmatpush.msra.mxu0 %v461
        %v463 = vand.u32 %v260, 4294901760
        %464 = vmatpush.msra.mxu0 %v463
        %v465 = vand.u32 %v259, 4294901760
        %466 = vmatpush.msra.mxu0 %v465
        %v467 = vand.u32 %v258, 4294901760
        %468 = vmatpush.msra.mxu0 %v467
        %v469 = vand.u32 %v257, 4294901760
        %470 = vmatpush.msra.mxu0 %v469
        %v471 = vand.u32 %v256, 4294901760
        %472 = vmatpush.msra.mxu0 %v471
        %v473 = vand.u32 %v255, 4294901760
        %474 = vmatpush.msra.mxu0 %v473
        %v475 = vand.u32 %v254, 4294901760
        %476 = vmatpush.msra.mxu0 %v475
        %v477 = vand.u32 %v253, 4294901760
        %478 = vmatpush.msra.mxu0 %v477
        %v479 = vand.u32 %v252, 4294901760
        %480 = vmatpush.msra.mxu0 %v479
        %v481 = vand.u32 %v251, 4294901760
        %482 = vmatpush.msra.mxu0 %v481
        %v483 = vand.u32 %v250, 4294901760
        %484 = vmatpush.msra.mxu0 %v483
        %v485 = vand.u32 %v249, 4294901760
        %486 = vmatpush.msra.mxu0 %v485
        %v487 = vand.u32 %v248, 4294901760
        %488 = vmatpush.msra.mxu0 %v487
        %v489 = vand.u32 %v247, 4294901760
        %490 = vmatpush.msra.mxu0 %v489
        %v491 = vand.u32 %v246, 4294901760
        %v492 = vsub.f32 %v246, %v491
        %v493 = vand.u32 %v492, 4294901760
        %494 = vmatmul.f32.gmra.mxu0 %v493
        %v495 = vpop.f32.mrf.mxu0
        %v496 = vadd.f32 %v457, %v495
        %497 = vdwg.mxu0
        %v498 = vand.u32 %v262, 4294901760
        %v499 = vsub.f32 %v262, %v498
        %v500 = vand.u32 %v499, 4294901760
        %501 = vmatpush.msra.mxu0 %v500
        %v502 = vand.u32 %v261, 4294901760
        %v503 = vsub.f32 %v261, %v502
        %v504 = vand.u32 %v503, 4294901760
        %505 = vmatpush.msra.mxu0 %v504
        %v506 = vand.u32 %v260, 4294901760
        %v507 = vsub.f32 %v260, %v506
        %v508 = vand.u32 %v507, 4294901760
        %509 = vmatpush.msra.mxu0 %v508
        %v510 = vand.u32 %v259, 4294901760
        %v511 = vsub.f32 %v259, %v510
        %v512 = vand.u32 %v511, 4294901760
        %513 = vmatpush.msra.mxu0 %v512
        %v514 = vand.u32 %v258, 4294901760
        %v515 = vsub.f32 %v258, %v514
        %v516 = vand.u32 %v515, 4294901760
        %517 = vmatpush.msra.mxu0 %v516
        %v518 = vand.u32 %v257, 4294901760
        %v519 = vsub.f32 %v257, %v518
        %v520 = vand.u32 %v519, 4294901760
        %521 = vmatpush.msra.mxu0 %v520
        %v522 = vand.u32 %v256, 4294901760
        %v523 = vsub.f32 %v256, %v522
        %v524 = vand.u32 %v523, 4294901760
        %525 = vmatpush.msra.mxu0 %v524
        %v526 = vand.u32 %v255, 4294901760
        %v527 = vsub.f32 %v255, %v526
        %v528 = vand.u32 %v527, 4294901760
        %529 = vmatpush.msra.mxu0 %v528
        %v530 = vand.u32 %v254, 4294901760
        %v531 = vsub.f32 %v254, %v530
        %v532 = vand.u32 %v531, 4294901760
        %533 = vmatpush.msra.mxu0 %v532
        %v534 = vand.u32 %v253, 4294901760
        %v535 = vsub.f32 %v253, %v534
        %v536 = vand.u32 %v535, 4294901760
        %537 = vmatpush.msra.mxu0 %v536
        %v538 = vand.u32 %v252, 4294901760
        %v539 = vsub.f32 %v252, %v538
        %v540 = vand.u32 %v539, 4294901760
        %541 = vmatpush.msra.mxu0 %v540
        %v542 = vand.u32 %v251, 4294901760
        %v543 = vsub.f32 %v251, %v542
        %v544 = vand.u32 %v543, 4294901760
        %545 = vmatpush.msra.mxu0 %v544
        %v546 = vand.u32 %v250, 4294901760
        %v547 = vsub.f32 %v250, %v546
        %v548 = vand.u32 %v547, 4294901760
        %549 = vmatpush.msra.mxu0 %v548
        %v550 = vand.u32 %v249, 4294901760
        %v551 = vsub.f32 %v249, %v550
        %v552 = vand.u32 %v551, 4294901760
        %553 = vmatpush.msra.mxu0 %v552
        %v554 = vand.u32 %v248, 4294901760
        %v555 = vsub.f32 %v248, %v554
        %v556 = vand.u32 %v555, 4294901760
        %557 = vmatpush.msra.mxu0 %v556
        %v558 = vand.u32 %v247, 4294901760
        %v559 = vsub.f32 %v247, %v558
        %v560 = vand.u32 %v559, 4294901760
        %561 = vmatpush.msra.mxu0 %v560
        %v562 = vand.u32 %v246, 4294901760
        %563 = vmatmul.f32.gmra.mxu0 %v562
        %v564 = vpop.f32.mrf.mxu0
        %v565 = vadd.f32 %v496, %v564
        %566 = vdwg.mxu0
        %v567 = vand.u32 %v262, 4294901760
        %568 = vmatpush.msra.mxu0 %v567
        %v569 = vand.u32 %v261, 4294901760
        %570 = vmatpush.msra.mxu0 %v569
        %v571 = vand.u32 %v260, 4294901760
        %572 = vmatpush.msra.mxu0 %v571
        %v573 = vand.u32 %v259, 4294901760
        %574 = vmatpush.msra.mxu0 %v573
        %v575 = vand.u32 %v258, 4294901760
        %576 = vmatpush.msra.mxu0 %v575
        %v577 = vand.u32 %v257, 4294901760
        %578 = vmatpush.msra.mxu0 %v577
        %v579 = vand.u32 %v256, 4294901760
        %580 = vmatpush.msra.mxu0 %v579
        %v581 = vand.u32 %v255, 4294901760
        %582 = vmatpush.msra.mxu0 %v581
        %v583 = vand.u32 %v254, 4294901760
        %584 = vmatpush.msra.mxu0 %v583
        %v585 = vand.u32 %v253, 4294901760
        %586 = vmatpush.msra.mxu0 %v585
        %v587 = vand.u32 %v252, 4294901760
        %588 = vmatpush.msra.mxu0 %v587
        %v589 = vand.u32 %v251, 4294901760
        %590 = vmatpush.msra.mxu0 %v589
        %v591 = vand.u32 %v250, 4294901760
        %592 = vmatpush.msra.mxu0 %v591
        %v593 = vand.u32 %v249, 4294901760
        %594 = vmatpush.msra.mxu0 %v593
        %v595 = vand.u32 %v248, 4294901760
        %596 = vmatpush.msra.mxu0 %v595
        %v597 = vand.u32 %v247, 4294901760
        %598 = vmatpush.msra.mxu0 %v597
        %v599 = vand.u32 %v246, 4294901760
        %600 = vmatmul.f32.gmra.mxu0 %v599
        %v601 = vpop.f32.mrf.mxu0
        %v602 = vadd.f32 %v565, %v601
        %603 = vdwg.mxu0
        %604 = vst [vmem:[%s219] sm:$0xff] %v602
        %v605 = vld [vmem:[%s219] sm:$0xff]
        %606 = vmax.xlane.f32.xlu0 %v605
        %v607 = vpop.xlane.xlu0 %606
        %v608 = vsub.f32 %v605, %v607
        %v609 = vmul.f32 %v608, 1.442695
        %v610 = vpow.pop %v609
        %611 = vadd.xlane.f32.xlu0 %v610
        %v612 = vpop.xlane.xlu0 %611
        %v613 = vlog2.pop %v612
        %v614 = vmul.f32 %v613, 0.6931472
        %v615 = vadd.f32 %v607, %v614
        %v616 = vld [vmem:[%s233] sm:$0xff]
        %617 = vset.pattern.permute.xlu0 0
        %618 = vperm.xlu0 %617, %v616
        %v619 = vpop.permute.xlu0 %618
        %vm620 = vcmp.eq.s32.totalorder %v240, %v619
        %v621 = vsel %vm620, %v605, 0.0
        %622 = vadd.xlane.f32.xlu0 %v621
        %v623 = vpop.xlane.xlu0 %622
        %s624 = smul.u32 %s20, 8
        %v625 = vlaneseq
        %v626 = vshrl.u32 %v625, 7
        %v627 = vstv %s624
        %v628 = vadd.s32 %v627, %v626
        %vm629 = vcmp.lt.s32.totalorder %v628, 16
        %v630 = vsub.f32 %v615, %v623
        %v631 = vsel %vm629, %v630, 0.0
        %vm632 = vcmask 7168
        %633 = vst.msk [vmem:[%s237] sm:$0xff] %vm632, %v631
        %s634 = sand.u32 %s101, 1
        %s635 = scalar_lea.sflag [#allocation4], %s634
        %s636 = sand.u32 %s101, 1
        %s637 = smul.addr %s636, 8
        %s638 = scalar_lea.vmem [#allocation5], %s637
        %p639 = scmp.lt.s32.totalorder %s20, 1
        %s640 = scalar_select %p639, %s20, 1
        %s641 = smul.addr %s640, 8
        %s642 = scalar_lea.vmem %s4, %s641
        // Predicated region
        $region37: #{tpu_custom_call.1} parent=31 // pred_check
          %p643 = pneg %p111
        $region38: #{tpu_custom_call.1} parent=31 // pred_check_branch
          %645 = sbr.rel (%p643) target = $region40
        $region39: #{tpu_custom_call.1} parent=31 // pred_region
          %647 = vsyncadd %s635, 0
          %s648 = smul.addr %s20, 8
          %s649 = scalar_lea.hbm %s3, %s648
          %s651 = sshll.u32 %s638, 4
          %s652 = int_to_ptr.vmem [resolvable:$true] %s651
          %s653 = sshll.u32 %s649, 4
          %s654 = int_to_ptr.hbm [resolvable:$true] %s653
          %656 = dma.vmem_to_hbm [thread:$0]  %s652, 128, %s654, %s635
        $region40: #{tpu_custom_call.1} parent=31 // pred_fallthru
          _
        // Predicated region
        $region41: #{tpu_custom_call.1} parent=31 // pred_check
          %p657 = pneg %p137
        $region42: #{tpu_custom_call.1} parent=31 // pred_check_branch
          %659 = sbr.rel (%p657) target = $region44
        $region43: #{tpu_custom_call.1} parent=31 // pred_region
          _
        $region44: #{tpu_custom_call.1} parent=31 // pred_fallthru
          _
      $region32: #{tpu_custom_call.1} parent=5 // pred_fallthru
        _
      %p660 = scmp.le.s32.totalorder 2, %s15
      // Predicated region
      $region45: #{tpu_custom_call.1} parent=5 // pred_check
        %p661 = pneg %p660
      $region46: #{tpu_custom_call.1} parent=5 // pred_check_branch
        %663 = sbr.rel (%p661) target = $region48
      $region47: #{tpu_custom_call.1} parent=5 // pred_region
        %s664 = ssub.s32 %s15, 2
        // Predicated region
        $region49: #{tpu_custom_call.1} parent=47 // pred_check
          %p665 = pneg %p117
        $region50: #{tpu_custom_call.1} parent=47 // pred_check_branch
          %667 = sbr.rel (%p665) target = $region52
        $region51: #{tpu_custom_call.1} parent=47 // pred_region
          %s668 = sand.u32 %s102, 1
          %s669 = scalar_lea.sflag [#allocation4], %s668
          %s670 = sand.u32 %s102, 1
          %s671 = smul.addr %s670, 8
          %s672 = scalar_lea.vmem [#allocation5], %s671
          %674 = dma.done %s669, 128
        $region52: #{tpu_custom_call.1} parent=47 // pred_fallthru
          _
        // Predicated region
        $region53: #{tpu_custom_call.1} parent=47 // pred_check
          %p675 = pneg %p143
        $region54: #{tpu_custom_call.1} parent=47 // pred_check_branch
          %677 = sbr.rel (%p675) target = $region56
        $region55: #{tpu_custom_call.1} parent=47 // pred_region
          %p678 = scmp.lt.s32.totalorder %s21, 1
          %s679 = scalar_select %p678, %s21, 1
          %s680 = smul.addr %s679, 8
          %s681 = scalar_lea.vmem %s4, %s680
        $region56: #{tpu_custom_call.1} parent=47 // pred_fallthru
          _
      $region48: #{tpu_custom_call.1} parent=5 // pred_fallthru
        _
    $region6: #{tpu_custom_call.1} parent=1 // loop_footer
      %s19 = sadd.s32 1, %s15
    $region7: #{tpu_custom_call.1} parent=1 // loop_footer_branch
      %14 = sbr.rel target = $region3
    $region8: #{tpu_custom_call.1} parent=1 // loop_exit
      _
    %682 = vsyncpa [#allocation3], 1
    %s683 = scalar_lea.sflag [#allocation3], 1
    %684 = vsyncpa %s683, 1
    %685 = vsyncpa [#allocation4], 1
    %s686 = scalar_lea.sflag [#allocation4], 1
    %687 = vsyncpa %s686, 1

</llo_original>
